<compile_context>
chip_gen: v7x
topology: tpu7x:2x2x1
jax: 0.10.0
libtpu: 0.0.40
codegen_flags: <defaults>
</compile_context>

<pallas_src>
import numpy as np
import jax
import jax.numpy as jnp
from jax import lax
from jax.experimental import pallas as pl
from jax.experimental.pallas import tpu as pltpu

KSIZE = 7   # SAM kernel_size
PAD = 3     # SAM padding


def cbam_kernel(x_ref, w1t_ref, w2t_ref, k_ref, o_ref):
    # x_ref  : (NB, C, HW)    bf16 VMEM  (lane-dense: HW on lanes, C on sublanes)
    # w1t_ref: (C, Cr)        f32  VMEM  (torch Linear(ch, ch//r).weight, transposed)
    # w2t_ref: (Cr, C)        f32  VMEM  (torch Linear(ch//r, ch).weight, transposed)
    # k_ref  : (2*HW, HW)     f32  VMEM  (flattened dense banded conv matrix)
    # o_ref  : (NB, C, HW)    bf16 VMEM
    x = x_ref[...].astype(jnp.float32)                     # (NB, C, HW) f32 math

    nb = x.shape[0]

    # ---------------- Channel Attention Module (CAM) ----------------
    avg = jnp.mean(x, axis=2)                              # (NB, C) global avg pool
    mx = jnp.max(x, axis=2)                                # (NB, C) global max pool
    pooled = jnp.concatenate([avg, mx], axis=0)            # (2*NB, C) -> one MXU push

    h = jnp.maximum(
        jnp.dot(pooled, w1t_ref[...], preferred_element_type=jnp.float32), 0.0)  # (2*NB, Cr)
    m = jnp.dot(h, w2t_ref[...], preferred_element_type=jnp.float32)             # (2*NB, C)
    feat_c = jax.nn.sigmoid(m[:nb] + m[nb:])               # (NB, C)

    xc = x * feat_c[:, :, None]                            # channel-refined (for reductions)

    # ---------------- Spatial Attention Module (SAM) ----------------
    mean_c = jnp.mean(xc, axis=1)                          # (NB, HW) mean over channels
    max_c = jnp.max(xc, axis=1)                            # (NB, HW) max over channels
    feats = jnp.concatenate([mean_c, max_c], axis=1)       # (NB, 2*HW)

    # 7x7 conv (2->1 channels, padding=3, no bias) as a single matmul against the
    # precomputed banded matrix (zero entries implement the zero padding).
    conv = jnp.dot(feats, k_ref[...], preferred_element_type=jnp.float32)  # (NB, HW)
    feat_s = jax.nn.sigmoid(conv)                          # (NB, HW)

    # Recompute the gated product from the resident x block (avoid re-reading spilled xc).
    o_ref[...] = (x * (feat_c[:, :, None] * feat_s[:, None, :])).astype(o_ref.dtype)


def _build_sam_conv_matrix(wconv, H, W):
    """Expand the (1, 2, 7, 7) SAM conv weight into K of shape (2*HW, HW) such that
    conv_out_flat[n, p] = feats_flat[n, :] @ K[:, p] with feats_flat = [mean | max]
    (zero padding = 3 is encoded by the zero entries).  Pure NumPy, run once."""
    wconv = np.asarray(wconv, dtype=np.float32)
    HW = H * W
    p = np.arange(HW)
    py, px = p // W, p % W
    K = np.zeros((2, HW, HW), np.float32)
    for ky in range(KSIZE):
        for kx in range(KSIZE):
            sy = py + (ky - PAD)                           # source row for each output p
            sx = px + (kx - PAD)                           # source col for each output p
            valid = (sy >= 0) & (sy < H) & (sx >= 0) & (sx < W)
            q = np.clip(sy, 0, H - 1) * W + np.clip(sx, 0, W - 1)
            for c in range(2):
                K[c, q[valid], p[valid]] += wconv[0, c, ky, kx]
    return K.reshape(2 * HW, HW)


def _pick_batch_block(N, C, HW, io_bytes=2, target_bytes=4 << 20):
    """Batch-block size: ~target_bytes per block, but capped at ceil(N/2) so the grid
    always has >= 2 steps (lets v7x's two TensorCores split the batch axis)."""
    per_n = max(1, C * HW * io_bytes)
    cap = max(1, target_bytes // per_n)
    if N >= 2:
        cap = min(cap, -(-N // 2))                         # ceil(N/2) -> grid >= 2
    return max(1, min(cap, N))


def make_cbam_forward(w1, w2, wconv, H, W):
    """Precompute (once) the transposed MLP weights and the dense conv matrix K, and
    return a jitted forward(x) -> (N, C, H, W) f32."""
    C = w1.shape[1]
    Cr = w1.shape[0]
    HW = H * W
    w1t = jnp.asarray(w1, jnp.float32).T                   # (C, Cr)
    w2t = jnp.asarray(w2, jnp.float32).T                   # (Cr, C)
    k_mat = jnp.asarray(_build_sam_conv_matrix(wconv, H, W))   # (2*HW, HW) f32

    @jax.jit
    def forward(x):
        N = x.shape[0]
        # Lane-dense layout + bf16 HBM storage (f32 math happens inside the kernel).
        x_flat = x.astype(jnp.bfloat16).reshape(N, C, HW)

        NB = _pick_batch_block(N, C, HW, io_bytes=2)
        grid_n = pl.cdiv(N, NB)
        N_pad = NB * grid_n
        if N_pad != N:
            x_flat = jnp.pad(x_flat, ((0, N_pad - N), (0, 0), (0, 0)))

        out_flat = pl.pallas_call(
            cbam_kernel,
            out_shape=jax.ShapeDtypeStruct((N_pad, C, HW), jnp.bfloat16),
            grid=(grid_n,),
            in_specs=[
                pl.BlockSpec((NB, C, HW), lambda n: (n, 0, 0)),
                pl.BlockSpec((C, Cr), lambda n: (0, 0)),
                pl.BlockSpec((Cr, C), lambda n: (0, 0)),
                pl.BlockSpec((2 * HW, HW), lambda n: (0, 0)),
            ],
            out_specs=pl.BlockSpec((NB, C, HW), lambda n: (n, 0, 0)),
            compiler_params=pltpu.CompilerParams(
                dimension_semantics=("parallel",),          # disjoint batch slabs -> 2 TCs on v7x
                vmem_limit_bytes=32 * 1024 * 1024,          # blocks + K stay well below this
            ),
        )(x_flat, w1t, w2t, k_mat)

        return out_flat[:N].reshape(N, C, H, W).astype(jnp.float32)

    return forward


def cbam_reference(x, w1, w2, wconv):
    """Pure-JAX reference matching the PyTorch CBAM forward (f32)."""
    # CAM
    avg = x.mean(axis=(2, 3))                              # (N, C)
    mx = x.max(axis=(2, 3))                                # (N, C)
    h1 = jnp.maximum(avg @ w1.T, 0.0) @ w2.T
    h2 = jnp.maximum(mx @ w1.T, 0.0) @ w2.T
    feat_c = jax.nn.sigmoid(h1 + h2)[:, :, None, None]
    xc = x * feat_c
    # SAM
    mean_c = xc.mean(axis=1, keepdims=True)
    max_c = xc.max(axis=1, keepdims=True)
    feats = jnp.concatenate([mean_c, max_c], axis=1)       # (N, 2, H, W)
    conv = lax.conv_general_dilated(
        feats, wconv, window_strides=(1, 1), padding=[(PAD, PAD), (PAD, PAD)],
        dimension_numbers=("NCHW", "OIHW", "NCHW"),
        precision=lax.Precision.HIGHEST)
    feat_s = jax.nn.sigmoid(conv)
    return xc * feat_s


if __name__ == "__main__":
    N, C, H, W = 2, 16, 16, 16   # channel=16, ratio=8 -> hidden=2
    Cr = C // 8

    key = jax.random.PRNGKey(0)
    k_x, k_w1, k_w2, k_wc = jax.random.split(key, 4)
    x = jax.random.normal(k_x, (N, C, H, W), jnp.float32)
    w1 = jax.random.normal(k_w1, (Cr, C), jnp.float32) * 0.1      # Linear(ch, ch//8).weight
    w2 = jax.random.normal(k_w2, (C, Cr), jnp.float32) * 0.1      # Linear(ch//8, ch).weight
    wconv = jax.random.normal(k_wc, (1, 2, KSIZE, KSIZE), jnp.float32) * 0.1  # Conv2d(2,1,7).weight

    cbam = make_cbam_forward(w1, w2, np.asarray(wconv), H, W)
    out = jax.block_until_ready(cbam(x))

    # Reference on the bf16-quantized input (same quantization the kernel applies on the
    # HBM side), so the comparison only measures in-kernel error + bf16 output rounding.
    x_q = x.astype(jnp.bfloat16).astype(jnp.float32)
    with jax.default_matmul_precision("highest"):
        ref = cbam_reference(x_q, w1, w2, wconv)
    ref = jax.block_until_ready(ref)

    assert out.shape == ref.shape == (N, C, H, W)
    max_err = jnp.max(jnp.abs(out - ref))
    assert jnp.allclose(out, ref, atol=3e-2, rtol=3e-2), f"max abs err {max_err}"

    print("KERNEL_OK")
</pallas_src>

<mosaic_0001>
module attributes {stable_mosaic.version = 11 : i64} {
  func.func @cbam_kernel(%arg0: i32, %arg1: memref<1x16x256xbf16, #tpu.memory_space<vmem>>, %arg2: memref<16x2xf32, #tpu.memory_space<vmem>>, %arg3: memref<2x16xf32, #tpu.memory_space<vmem>>, %arg4: memref<512x256xf32, #tpu.memory_space<vmem>>, %arg5: memref<1x16x256xbf16, #tpu.memory_space<vmem>>) attributes {dimension_semantics = [#tpu.dimension_semantics<parallel>], iteration_bounds = array<i64: 2>, scalar_prefetch = 0 : i64, scratch_operands = 0 : i64, tpu.core_type = #tpu.core_type<tc>, window_params = [{transform_indices = @transform_0, window_bounds = array<i64: 1, 16, 256>}, {pipeline_mode = #tpu.pipeline_mode<synchronous>, transform_indices = @transform_1, window_bounds = array<i64: 16, 2>}, {pipeline_mode = #tpu.pipeline_mode<synchronous>, transform_indices = @transform_2, window_bounds = array<i64: 2, 16>}, {pipeline_mode = #tpu.pipeline_mode<synchronous>, transform_indices = @transform_3, window_bounds = array<i64: 512, 256>}, {transform_indices = @transform_4, window_bounds = array<i64: 1, 16, 256>}]} {
    %c0 = arith.constant 0 : index
    %c0_0 = arith.constant 0 : index
    %c0_1 = arith.constant 0 : index
    %0 = vector.load %arg1[%c0, %c0_0, %c0_1] : memref<1x16x256xbf16, #tpu.memory_space<vmem>>, vector<1x16x256xbf16>
    %1 = arith.extf %0 : vector<1x16x256xbf16> to vector<1x16x256xf32>
    %cst = arith.constant dense<0.000000e+00> : vector<1x16xf32>
    %2 = vector.multi_reduction <add>, %1, %cst [2] : vector<1x16x256xf32> to vector<1x16xf32>
    %cst_2 = arith.constant 2.560000e+02 : f32
    %3 = vector.broadcast %cst_2 : f32 to vector<1x16xf32>
    %4 = arith.divf %2, %3 : vector<1x16xf32>
    %cst_3 = arith.constant dense<0xFF800000> : vector<1x16xf32>
    %5 = vector.multi_reduction <maximumf>, %1, %cst_3 [2] : vector<1x16x256xf32> to vector<1x16xf32>
    %6 = tpu.concatenate %4, %5 in 0 : vector<1x16xf32>, vector<1x16xf32> -> vector<2x16xf32>
    %c0_4 = arith.constant 0 : index
    %c0_5 = arith.constant 0 : index
    %7 = vector.load %arg2[%c0_4, %c0_5] : memref<16x2xf32, #tpu.memory_space<vmem>>, vector<16x2xf32>
    %cst_6 = arith.constant dense<0.000000e+00> : vector<2x2xf32>
    %8 = tpu.matmul %6, %7, %cst_6 {dimension_numbers = #tpu.dot_dimension_numbers<[1], [0], [0], [1], [0, 0, 1, 1], [], []>} : vector<2x16xf32>, vector<16x2xf32>, vector<2x2xf32> -> vector<2x2xf32>
    %cst_7 = arith.constant 0.000000e+00 : f32
    %9 = vector.broadcast %cst_7 : f32 to vector<2x2xf32>
    %10 = arith.maximumf %8, %9 : vector<2x2xf32>
    %c0_8 = arith.constant 0 : index
    %c0_9 = arith.constant 0 : index
    %11 = vector.load %arg3[%c0_8, %c0_9] : memref<2x16xf32, #tpu.memory_space<vmem>>, vector<2x16xf32>
    %cst_10 = arith.constant dense<0.000000e+00> : vector<2x16xf32>
    %12 = tpu.matmul %10, %11, %cst_10 {dimension_numbers = #tpu.dot_dimension_numbers<[1], [0], [0], [1], [0, 0, 1, 1], [], []>} : vector<2x2xf32>, vector<2x16xf32>, vector<2x16xf32> -> vector<2x16xf32>
    %13 = vector.extract_strided_slice %12 {offsets = [0, 0], sizes = [1, 16], strides = [1, 1]} : vector<2x16xf32> to vector<1x16xf32>
    %14 = vector.extract_strided_slice %12 {offsets = [1, 0], sizes = [1, 16], strides = [1, 1]} : vector<2x16xf32> to vector<1x16xf32>
    %15 = arith.addf %13, %14 : vector<1x16xf32>
    %16 = arith.negf %15 : vector<1x16xf32>
    %17 = math.exp %16 : vector<1x16xf32>
    %cst_11 = arith.constant 1.000000e+00 : f32
    %18 = vector.broadcast %cst_11 : f32 to vector<1x16xf32>
    %19 = arith.addf %18, %17 : vector<1x16xf32>
    %20 = arith.divf %18, %19 : vector<1x16xf32>
    %21 = vector.shape_cast %20 : vector<1x16xf32> to vector<1x16x1xf32>
    %22 = vector.broadcast %21 : vector<1x16x1xf32> to vector<1x16x256xf32>
    %23 = arith.mulf %1, %22 : vector<1x16x256xf32>
    %cst_12 = arith.constant dense<0.000000e+00> : vector<1x256xf32>
    %24 = vector.multi_reduction <add>, %23, %cst_12 [1] : vector<1x16x256xf32> to vector<1x256xf32>
    %cst_13 = arith.constant 1.600000e+01 : f32
    %25 = vector.broadcast %cst_13 : f32 to vector<1x256xf32>
    %26 = arith.divf %24, %25 : vector<1x256xf32>
    %cst_14 = arith.constant dense<0xFF800000> : vector<1x256xf32>
    %27 = vector.multi_reduction <maximumf>, %23, %cst_14 [1] : vector<1x16x256xf32> to vector<1x256xf32>
    %28 = tpu.concatenate %26, %27 in 1 : vector<1x256xf32>, vector<1x256xf32> -> vector<1x512xf32>
    %c0_15 = arith.constant 0 : index
    %c0_16 = arith.constant 0 : index
    %29 = vector.load %arg4[%c0_15, %c0_16] : memref<512x256xf32, #tpu.memory_space<vmem>>, vector<512x256xf32>
    %cst_17 = arith.constant dense<0.000000e+00> : vector<1x256xf32>
    %30 = tpu.matmul %28, %29, %cst_17 {dimension_numbers = #tpu.dot_dimension_numbers<[1], [0], [0], [1], [0, 0, 1, 1], [], []>} : vector<1x512xf32>, vector<512x256xf32>, vector<1x256xf32> -> vector<1x256xf32>
    %31 = arith.negf %30 : vector<1x256xf32>
    %32 = math.exp %31 : vector<1x256xf32>
    %cst_18 = arith.constant 1.000000e+00 : f32
    %33 = vector.broadcast %cst_18 : f32 to vector<1x256xf32>
    %34 = arith.addf %33, %32 : vector<1x256xf32>
    %35 = arith.divf %33, %34 : vector<1x256xf32>
    %36 = vector.shape_cast %20 : vector<1x16xf32> to vector<1x16x1xf32>
    %37 = vector.shape_cast %35 : vector<1x256xf32> to vector<1x1x256xf32>
    %38 = vector.broadcast %36 : vector<1x16x1xf32> to vector<1x16x256xf32>
    %39 = vector.broadcast %37 : vector<1x1x256xf32> to vector<1x16x256xf32>
    %40 = arith.mulf %38, %39 : vector<1x16x256xf32>
    %41 = arith.mulf %1, %40 : vector<1x16x256xf32>
    %42 = arith.truncf %41 : vector<1x16x256xf32> to vector<1x16x256xbf16>
    %c0_19 = arith.constant 0 : index
    %c0_20 = arith.constant 0 : index
    %c0_21 = arith.constant 0 : index
    %43 = vector.load %arg5[%c0_19, %c0_20, %c0_21] : memref<1x16x256xbf16, #tpu.memory_space<vmem>>, vector<1x16x256xbf16>
    tpu.vector_store %arg5[%c0_19, %c0_20, %c0_21], %42 {strides = array<i32>} : memref<1x16x256xbf16, #tpu.memory_space<vmem>>, vector<1x16x256xbf16>,
    return
  }
  func.func @transform_0(%arg0: i32) -> (i32, i32, i32) {
    %c0_i32 = arith.constant 0 : i32
    %c0_i32_0 = arith.constant 0 : i32
    %c0_i32_1 = arith.constant 0 : i32
    return %arg0, %c0_i32, %c0_i32_0 : i32, i32, i32
  }
  func.func @transform_1(%arg0: i32) -> (i32, i32) {
    %c0_i32 = arith.constant 0 : i32
    %c0_i32_0 = arith.constant 0 : i32
    %c0_i32_1 = arith.constant 0 : i32
    return %c0_i32, %c0_i32_0 : i32, i32
  }
  func.func @transform_2(%arg0: i32) -> (i32, i32) {
    %c0_i32 = arith.constant 0 : i32
    %c0_i32_0 = arith.constant 0 : i32
    %c0_i32_1 = arith.constant 0 : i32
    return %c0_i32, %c0_i32_0 : i32, i32
  }
  func.func @transform_3(%arg0: i32) -> (i32, i32) {
    %c0_i32 = arith.constant 0 : i32
    %c0_i32_0 = arith.constant 0 : i32
    %c0_i32_1 = arith.constant 0 : i32
    return %c0_i32, %c0_i32_0 : i32, i32
  }
  func.func @transform_4(%arg0: i32) -> (i32, i32, i32) {
    %c0_i32 = arith.constant 0 : i32
    %c0_i32_0 = arith.constant 0 : i32
    %c0_i32_1 = arith.constant 0 : i32
    return %arg0, %c0_i32, %c0_i32_0 : i32, i32, i32
  }
}

</mosaic_0001>

<llo_original>
// kernel: forward.1
$region0: #{forward.1}
  #allocation0 [shape = 'u32[]', space=smem, size = 0x4, offset = 0x4, fixed_abs, tag = 'smem constant byte address 0x4 - core index']
  #allocation1 [shape = 'u32[144,128]{1,0:T(1,128)}', space=vmem, size = 0x12000, scoped, tag = 'internal scratch']
  %s0 = inlined_call_operand.vmem [shape: bf16[2,16,256], index: 0, kind: input, shape index: {}]
  %s1 = inlined_call_operand.vmem [shape: f32[16,2], index: 1, kind: input, shape index: {}]
  %s2 = inlined_call_operand.vmem [shape: f32[2,16], index: 2, kind: input, shape index: {}]
  %s3 = inlined_call_operand.vmem [shape: f32[512,256], index: 3, kind: input, shape index: {}]
  %s4 = inlined_call_operand.vmem [shape: bf16[2,16,256], index: 4, kind: output, shape index: {}]
  %s5 = sld [smem:[#allocation0]]
  $region49: #{forward.1} parent=0
    _
  %s7 = ssub.s32 1, %s5
  %s8 = scalar_select 0, %s7, %s5
  loop: start=0, step=1, limit=4
  $region2: #{forward.1} parent=0 // loop_pre_header
    _
  $region3: #{forward.1} parent=0 // loop_header
    %s10 = sphi 0, %s14
    %p11 = scmp.ge.s32.totalorder %s10, 4
    %s20 = sphi 0, %s22
    %s23 = sphi 0, %s20
    %s24 = sphi 0, %s23
    %s40 = sphi 0, %s24
    %s44 = sphi 0, %s44
    %s46 = sphi 0, %s44
    %s47 = sphi 0, %s46
    %s61 = sphi 0, %s47
    %s65 = sphi 0, %s65
    %s67 = sphi 0, %s65
    %s68 = sphi 0, %s67
    %s82 = sphi 0, %s68
    %s86 = sphi 0, %s86
    %s88 = sphi 0, %s86
    %s89 = sphi 0, %s88
    %s103 = sphi 0, %s89
    %s109 = sphi 0, %s111
    %s112 = sphi 0, %s109
    %s113 = sphi 0, %s112
    %s129 = sphi 0, %s113
  $region4: #{forward.1} parent=0 // loop_header_branch
    %13 = sbr.rel (%p11) target = $region8
  $region5: #{forward.1} parent=0 // loop_body
    %s15 = ssub.s32 %s10, 1
    %s16 = ssub.s32 %s10, 2
    %s17 = sadd.s32 %s10, 1
    %s18 = ssub.s32 %s10, %s17
    %p19 = scmp.eq.s32.totalorder %s18, 0
    %s21 = sadd.s32 %s20, 1
    %s22 = scalar_select %p19, %s20, %s21
    %p25 = pneg %p19
    %p26 = scmp.eq.s32.totalorder %s10, 1
    %p27 = por %p25, %p26
    %p28 = scmp.ne.s32.totalorder %s20, %s23
    %p29 = scmp.eq.s32.totalorder %s10, 0
    %p30 = por %p28, %p29
    %p31 = scmp.ne.s32.totalorder %s20, %s23
    %p32 = scmp.eq.s32.totalorder %s15, 1
    %p33 = por %p31, %p32
    %p34 = scmp.ne.s32.totalorder %s23, %s24
    %p35 = scmp.eq.s32.totalorder %s15, 0
    %p36 = por %p34, %p35
    %p37 = scmp.ne.s32.totalorder %s23, %s24
    %p38 = scmp.eq.s32.totalorder %s16, 1
    %p39 = por %p37, %p38
    %p41 = scmp.ne.s32.totalorder %s24, %s40
    %p42 = scmp.eq.s32.totalorder %s16, 0
    %p43 = por %p41, %p42
    %s45 = sadd.s32 %s44, 1
    %p48 = scmp.eq.s32.totalorder %s10, 1
    %p49 = scmp.ne.s32.totalorder %s44, %s46
    %p50 = scmp.eq.s32.totalorder %s10, 0
    %p51 = por %p49, %p50
    %p52 = scmp.ne.s32.totalorder %s44, %s46
    %p53 = scmp.eq.s32.totalorder %s15, 1
    %p54 = por %p52, %p53
    %p55 = scmp.ne.s32.totalorder %s46, %s47
    %p56 = scmp.eq.s32.totalorder %s15, 0
    %p57 = por %p55, %p56
    %p58 = scmp.ne.s32.totalorder %s46, %s47
    %p59 = scmp.eq.s32.totalorder %s16, 1
    %p60 = por %p58, %p59
    %p62 = scmp.ne.s32.totalorder %s47, %s61
    %p63 = scmp.eq.s32.totalorder %s16, 0
    %p64 = por %p62, %p63
    %s66 = sadd.s32 %s65, 1
    %p69 = scmp.eq.s32.totalorder %s10, 1
    %p70 = scmp.ne.s32.totalorder %s65, %s67
    %p71 = scmp.eq.s32.totalorder %s10, 0
    %p72 = por %p70, %p71
    %p73 = scmp.ne.s32.totalorder %s65, %s67
    %p74 = scmp.eq.s32.totalorder %s15, 1
    %p75 = por %p73, %p74
    %p76 = scmp.ne.s32.totalorder %s67, %s68
    %p77 = scmp.eq.s32.totalorder %s15, 0
    %p78 = por %p76, %p77
    %p79 = scmp.ne.s32.totalorder %s67, %s68
    %p80 = scmp.eq.s32.totalorder %s16, 1
    %p81 = por %p79, %p80
    %p83 = scmp.ne.s32.totalorder %s68, %s82
    %p84 = scmp.eq.s32.totalorder %s16, 0
    %p85 = por %p83, %p84
    %s87 = sadd.s32 %s86, 1
    %p90 = scmp.eq.s32.totalorder %s10, 1
    %p91 = scmp.ne.s32.totalorder %s86, %s88
    %p92 = scmp.eq.s32.totalorder %s10, 0
    %p93 = por %p91, %p92
    %p94 = scmp.ne.s32.totalorder %s86, %s88
    %p95 = scmp.eq.s32.totalorder %s15, 1
    %p96 = por %p94, %p95
    %p97 = scmp.ne.s32.totalorder %s88, %s89
    %p98 = scmp.eq.s32.totalorder %s15, 0
    %p99 = por %p97, %p98
    %p100 = scmp.ne.s32.totalorder %s88, %s89
    %p101 = scmp.eq.s32.totalorder %s16, 1
    %p102 = por %p100, %p101
    %p104 = scmp.ne.s32.totalorder %s89, %s103
    %p105 = scmp.eq.s32.totalorder %s16, 0
    %p106 = por %p104, %p105
    %s107 = ssub.s32 %s10, %s17
    %p108 = scmp.eq.s32.totalorder %s107, 0
    %s110 = sadd.s32 %s109, 1
    %s111 = scalar_select %p108, %s109, %s110
    %p114 = pneg %p108
    %p115 = scmp.eq.s32.totalorder %s10, 1
    %p116 = por %p114, %p115
    %p117 = scmp.ne.s32.totalorder %s109, %s112
    %p118 = scmp.eq.s32.totalorder %s10, 0
    %p119 = por %p117, %p118
    %p120 = scmp.ne.s32.totalorder %s109, %s112
    %p121 = scmp.eq.s32.totalorder %s15, 1
    %p122 = por %p120, %p121
    %p123 = scmp.ne.s32.totalorder %s112, %s113
    %p124 = scmp.eq.s32.totalorder %s15, 0
    %p125 = por %p123, %p124
    %p126 = scmp.ne.s32.totalorder %s112, %s113
    %p127 = scmp.eq.s32.totalorder %s16, 1
    %p128 = por %p126, %p127
    %p130 = scmp.ne.s32.totalorder %s113, %s129
    %p131 = scmp.eq.s32.totalorder %s16, 0
    %p132 = por %p130, %p131
    %p133 = scmp.le.s32.totalorder 1, %s10
    %p134 = scmp.lt.s32.totalorder %s10, 3
    %p135 = pnand %p133, %p134
    %p136 = pneg %p135
    // Predicated region
    $region9: #{forward.1} parent=5 // pred_check
      _
    $region10: #{forward.1} parent=5 // pred_check_branch
      %138 = sbr.rel (%p135) target = $region12
    $region11: #{forward.1} parent=5 // pred_region
      %s139 = ssub.s32 %s10, 1
      // Predicated region
      $region13: #{forward.1} parent=11 // pred_check
        %p140 = pneg %p57
      $region14: #{forward.1} parent=11 // pred_check_branch
        %142 = sbr.rel (%p140) target = $region16
      $region15: #{forward.1} parent=11 // pred_region
        _
      $region16: #{forward.1} parent=11 // pred_fallthru
        _
      // Predicated region
      $region17: #{forward.1} parent=11 // pred_check
        %p143 = pneg %p78
      $region18: #{forward.1} parent=11 // pred_check_branch
        %145 = sbr.rel (%p143) target = $region20
      $region19: #{forward.1} parent=11 // pred_region
        _
      $region20: #{forward.1} parent=11 // pred_fallthru
        _
      // Predicated region
      $region21: #{forward.1} parent=11 // pred_check
        %p146 = pneg %p99
      $region22: #{forward.1} parent=11 // pred_check_branch
        %148 = sbr.rel (%p146) target = $region24
      $region23: #{forward.1} parent=11 // pred_region
        _
      $region24: #{forward.1} parent=11 // pred_fallthru
        _
    $region12: #{forward.1} parent=5 // pred_fallthru
      _
    %p149 = scmp.lt.s32.totalorder %s10, 2
    // Predicated region
    $region25: #{forward.1} parent=5 // pred_check
      %p150 = pneg %p149
    $region26: #{forward.1} parent=5 // pred_check_branch
      %152 = sbr.rel (%p150) target = $region28
    $region27: #{forward.1} parent=5 // pred_region
      // Predicated region
      $region29: #{forward.1} parent=27 // pred_check
        %p153 = pneg %p30
      $region30: #{forward.1} parent=27 // pred_check_branch
        %155 = sbr.rel (%p153) target = $region32
      $region31: #{forward.1} parent=27 // pred_region
        %p156 = scmp.lt.s32.totalorder %s10, 1
        %s157 = scalar_select %p156, %s10, 1
        %s158 = smul.addr %s157, 4
        %s159 = smul.addr %s158, 4
        %s160 = scalar_lea.vmem %s0, %s159
      $region32: #{forward.1} parent=27 // pred_fallthru
        _
    $region28: #{forward.1} parent=5 // pred_fallthru
      _
    %p161 = scmp.le.s32.totalorder 1, %s10
    %p162 = scmp.lt.s32.totalorder %s10, 3
    %p163 = pnand %p161, %p162
    %p164 = pneg %p163
    // Predicated region
    $region33: #{forward.1} parent=5 // pred_check
      _
    $region34: #{forward.1} parent=5 // pred_check_branch
      %166 = sbr.rel (%p163) target = $region36
    $region35: #{forward.1} parent=5 // pred_region
      %s167 = ssub.s32 %s10, 1
      %p168 = scmp.lt.s32.totalorder %s15, 1
      %s169 = scalar_select %p168, %s15, 1
      %s170 = smul.addr %s169, 4
      %s171 = smul.addr %s170, 4
      %s172 = scalar_lea.vmem %s0, %s171
      %p173 = pneg %p36
      %p174 = pneg %p33
      %p175 = pneg %p57
      %p176 = pneg %p54
      %p177 = pneg %p78
      %p178 = pneg %p75
      %p179 = pneg %p99
      %p180 = pneg %p96
      %p181 = pneg %p125
      %p182 = pneg %p122
      %p183 = scmp.lt.s32.totalorder %s15, 1
      %s184 = scalar_select %p183, %s15, 1
      %s185 = smul.addr %s184, 4
      %s186 = smul.addr %s185, 4
      %s187 = scalar_lea.vmem %s4, %s186
      %p188 = scmp.lt.s32.totalorder %s15, 1
      %s189 = scalar_select %p188, %s15, 1
      %s190 = smul.addr %s189, 4
      %s191 = smul.addr %s190, 4
      %s192 = scalar_lea.vmem %s0, %s191
      %p193 = scmp.lt.s32.totalorder %s15, 1
      %s194 = scalar_select %p193, %s15, 1
      %s195 = smul.addr %s194, 4
      %s196 = smul.addr %s195, 4
      %s197 = scalar_lea.vmem %s4, %s196
      %v198 = vld [vmem:[%s192] sm:$0xff]
      %v199 = vld [vmem:[%s192 + $0x8] sm:$0xff]
      %v200 = vunpack.c.l.bf16 %v198
      %v201 = vunpack.c.h.bf16 %v198
      %v202 = vunpack.c.l.bf16 %v199
      %v203 = vunpack.c.h.bf16 %v199
      %v204 = vadd.f32 %v200, %v201
      %205 = vadd.xlane.f32.xlu0 %v204
      %v206 = vpop.xlane.xlu0 %205
      %v207 = vadd.f32 %v202, %v203
      %208 = vadd.xlane.f32.xlu0 %v207
      %v209 = vpop.xlane.xlu0 %208
      %v210 = vrcp.pop 256.0
      %v211 = vmul.f32 %v206, %v210
      %v212 = vmul.f32 %v209, %v210
      %v213 = vmax.f32 %v200, %v201
      %214 = vmax.xlane.f32.xlu0 %v213
      %v215 = vpop.xlane.xlu0 %214
      %v216 = vmax.f32 %v202, %v203
      %217 = vmax.xlane.f32.xlu0 %v216
      %v218 = vpop.xlane.xlu0 %217
      %v221 = vlaneseq
      %v222 = vand.u32 %v221, 127
      %v223 = vlaneseq
      %v224 = vshrl.u32 %v223, 7
      %v225 = vsub.s32 %v222, %v224
      %v226 = vrot.slane %v211, %v225
      %v227 = vadd.s32 %v222, 4294967288
      %v228 = vlaneseq
      %v229 = vshrl.u32 %v228, 7
      %v230 = vsub.s32 %v227, %v229
      %v231 = vrot.slane %v212, %v230
      %vm232 = vcmask 130112
      %v233 = vsel %vm232, %v231, %v226
      %v237 = vlaneseq
      %v238 = vshrl.u32 %v237, 7
      %v239 = vsub.s32 %v222, %v238
      %v240 = vrot.slane %v215, %v239
      %v241 = vlaneseq
      %v242 = vshrl.u32 %v241, 7
      %v243 = vsub.s32 %v227, %v242
      %v244 = vrot.slane %v218, %v243
      %v245 = vsel %vm232, %v244, %v240
      %vm247 = vcmask 1040384
      %v248 = vsel %vm247, %v233, %v245
      %v249 = vld [vmem:[%s1] sm:$0xff]
      %v250 = vld [vmem:[%s1 + $0x8] sm:$0xff]
      %vm251 = vcmask 130048
      %v253 = vsel %vm251, %v248, 0
      %255 = vmatprep.subr.mxu0 0.0
      %256 = vmatpush1.msra.mxu0 %v249
      %257 = vmatprep.subr.mxu0 0.0
      %258 = vmatpush1.msra.mxu0 %v250
      %259 = vmatprep.subr.mxu0 0.0
      %260 = vmatpush1.msra.mxu0 0.0
      %261 = vmatprep.subr.mxu0 0.0
      %262 = vmatpush1.msra.mxu0 0.0
      %263 = vmatprep.subr.mxu0 0.0
      %264 = vmatpush1.msra.mxu0 0.0
      %265 = vmatprep.subr.mxu0 0.0
      %266 = vmatpush1.msra.mxu0 0.0
      %267 = vmatprep.subr.mxu0 0.0
      %268 = vmatpush1.msra.mxu0 0.0
      %269 = vmatprep.subr.mxu0 0.0
      %270 = vmatpush1.msra.mxu0 0.0
      %271 = vmatprep.subr.mxu0 0.0
      %272 = vmatpush1.msra.mxu0 0.0
      %273 = vmatprep.subr.mxu0 0.0
      %274 = vmatpush1.msra.mxu0 0.0
      %275 = vmatprep.subr.mxu0 0.0
      %276 = vmatpush1.msra.mxu0 0.0
      %277 = vmatprep.subr.mxu0 0.0
      %278 = vmatpush1.msra.mxu0 0.0
      %279 = vmatprep.subr.mxu0 0.0
      %280 = vmatpush1.msra.mxu0 0.0
      %281 = vmatprep.subr.mxu0 0.0
      %282 = vmatpush1.msra.mxu0 0.0
      %283 = vmatprep.subr.mxu0 0.0
      %284 = vmatpush1.msra.mxu0 0.0
      %285 = vmatprep.subr.mxu0 0.0
      %286 = vmatpush1.msra.mxu0 0.0
      %287 = vmatprep.subr.mxu0 0.0
      %288 = vmatpush1.msra.mxu0 0.0
      %289 = vmatprep.subr.mxu0 0.0
      %290 = vmatpush1.msra.mxu0 0.0
      %291 = vmatprep.subr.mxu0 0.0
      %292 = vmatpush1.msra.mxu0 0.0
      %293 = vmatprep.subr.mxu0 0.0
      %294 = vmatpush1.msra.mxu0 0.0
      %295 = vmatprep.subr.mxu0 0.0
      %296 = vmatpush1.msra.mxu0 0.0
      %297 = vmatprep.subr.mxu0 0.0
      %298 = vmatpush1.msra.mxu0 0.0
      %299 = vmatprep.subr.mxu0 0.0
      %300 = vmatpush1.msra.mxu0 0.0
      %301 = vmatprep.subr.mxu0 0.0
      %302 = vmatpush1.msra.mxu0 0.0
      %303 = vmatprep.subr.mxu0 0.0
      %304 = vmatpush1.msra.mxu0 0.0
      %305 = vmatprep.subr.mxu0 0.0
      %306 = vmatpush1.msra.mxu0 0.0
      %307 = vmatprep.subr.mxu0 0.0
      %308 = vmatpush1.msra.mxu0 0.0
      %309 = vmatprep.subr.mxu0 0.0
      %310 = vmatpush1.msra.mxu0 0.0
      %311 = vmatprep.subr.mxu0 0.0
      %312 = vmatpush1.msra.mxu0 0.0
      %313 = vmatprep.subr.mxu0 0.0
      %314 = vmatpush1.msra.mxu0 0.0
      %315 = vmatprep.subr.mxu0 0.0
      %316 = vmatpush1.msra.mxu0 0.0
      %317 = vmatprep.subr.mxu0 0.0
      %318 = vmatpush1.msra.mxu0 0.0
      %319 = vmatprep.mubr.f32.mxu0 0.0
      %320 = vmatmul.mubr.f32.gmra.mrb[0].mxu0 %v253
      %v321 = vpop.f32.mrb[0].mxu0
      %v322 = vadd.f32 0.0, %v321
      %v323 = vpop.f32.mrb[0].mxu0
      %324 = vdwg.mxu0
      %v325 = vmax.f32 %v322, 0.0
      %v326 = vld [vmem:[%s2] sm:$0x3]
      %vm327 = vcmask 15360
      %v329 = vsel %vm327, %v325, 0
      %vm331 = vcmask 1041408
      %v333 = vsel %vm331, %v326, 0
      %335 = vmatprep.subr.mxu0 0.0
      %336 = vmatpush1.msra.mxu0 %v333
      %337 = vmatprep.subr.mxu0 0.0
      %338 = vmatpush1.msra.mxu0 0.0
      %339 = vmatprep.subr.mxu0 0.0
      %340 = vmatpush1.msra.mxu0 0.0
      %341 = vmatprep.subr.mxu0 0.0
      %342 = vmatpush1.msra.mxu0 0.0
      %343 = vmatprep.subr.mxu0 0.0
      %344 = vmatpush1.msra.mxu0 0.0
      %345 = vmatprep.subr.mxu0 0.0
      %346 = vmatpush1.msra.mxu0 0.0
      %347 = vmatprep.subr.mxu0 0.0
      %348 = vmatpush1.msra.mxu0 0.0
      %349 = vmatprep.subr.mxu0 0.0
      %350 = vmatpush1.msra.mxu0 0.0
      %351 = vmatprep.subr.mxu0 0.0
      %352 = vmatpush1.msra.mxu0 0.0
      %353 = vmatprep.subr.mxu0 0.0
      %354 = vmatpush1.msra.mxu0 0.0
      %355 = vmatprep.subr.mxu0 0.0
      %356 = vmatpush1.msra.mxu0 0.0
      %357 = vmatprep.subr.mxu0 0.0
      %358 = vmatpush1.msra.mxu0 0.0
      %359 = vmatprep.subr.mxu0 0.0
      %360 = vmatpush1.msra.mxu0 0.0
      %361 = vmatprep.subr.mxu0 0.0
      %362 = vmatpush1.msra.mxu0 0.0
      %363 = vmatprep.subr.mxu0 0.0
      %364 = vmatpush1.msra.mxu0 0.0
      %365 = vmatprep.subr.mxu0 0.0
      %366 = vmatpush1.msra.mxu0 0.0
      %367 = vmatprep.subr.mxu0 0.0
      %368 = vmatpush1.msra.mxu0 0.0
      %369 = vmatprep.subr.mxu0 0.0
      %370 = vmatpush1.msra.mxu0 0.0
      %371 = vmatprep.subr.mxu0 0.0
      %372 = vmatpush1.msra.mxu0 0.0
      %373 = vmatprep.subr.mxu0 0.0
      %374 = vmatpush1.msra.mxu0 0.0
      %375 = vmatprep.subr.mxu0 0.0
      %376 = vmatpush1.msra.mxu0 0.0
      %377 = vmatprep.subr.mxu0 0.0
      %378 = vmatpush1.msra.mxu0 0.0
      %379 = vmatprep.subr.mxu0 0.0
      %380 = vmatpush1.msra.mxu0 0.0
      %381 = vmatprep.subr.mxu0 0.0
      %382 = vmatpush1.msra.mxu0 0.0
      %383 = vmatprep.subr.mxu0 0.0
      %384 = vmatpush1.msra.mxu0 0.0
      %385 = vmatprep.subr.mxu0 0.0
      %386 = vmatpush1.msra.mxu0 0.0
      %387 = vmatprep.subr.mxu0 0.0
      %388 = vmatpush1.msra.mxu0 0.0
      %389 = vmatprep.subr.mxu0 0.0
      %390 = vmatpush1.msra.mxu0 0.0
      %391 = vmatprep.subr.mxu0 0.0
      %392 = vmatpush1.msra.mxu0 0.0
      %393 = vmatprep.subr.mxu0 0.0
      %394 = vmatpush1.msra.mxu0 0.0
      %395 = vmatprep.subr.mxu0 0.0
      %396 = vmatpush1.msra.mxu0 0.0
      %397 = vmatprep.subr.mxu0 0.0
      %398 = vmatpush1.msra.mxu0 0.0
      %399 = vmatprep.mubr.f32.mxu0 0.0
      %400 = vmatmul.mubr.f32.gmra.mrb[0].mxu0 %v329
      %v401 = vpop.f32.mrb[0].mxu0
      %v402 = vadd.f32 0.0, %v401
      %v403 = vpop.f32.mrb[0].mxu0
      %404 = vdwg.mxu0
      %v406 = vrot.slane %v402, 1
      %v408 = vadd.f32 %v402, %v406
      %v409 = vxor.u32 %v408, 2147483648
      %v410 = vmul.f32 %v409, 1.442695
      %v411 = vpow.pop %v410
      %v412 = vadd.f32 %v411, 1.0
      %v413 = vrcp.pop %v412
      %v414 = vmul.f32 1.0, %v413
      %v415 = vlaneseq
      %v416 = vshrl.u32 %v415, 7
      %v417 = vsub.s32 0, %v416
      %v418 = vrot.slane %v414, %v417
      %420 = vbcast.lane.b32.xlu0 %v418, 256
      %v421 = vpop.permute.xlu0 %420
      %s423 = sor.u32 256, 8
      %424 = vbcast.lane.b32.xlu0 %v418, %s423
      %v425 = vpop.permute.xlu0 %424
      %v426 = vmul.f32 %v200, %v421
      %v427 = vmul.f32 %v201, %v421
      %v428 = vmul.f32 %v202, %v425
      %v429 = vmul.f32 %v203, %v425
      %v430 = vadd.f32 %v426, %v428
      %v431 = vrot.slane %v430, 4
      %v432 = vadd.f32 %v430, %v431
      %v433 = vrot.slane %v432, 2
      %v434 = vadd.f32 %v432, %v433
      %v435 = vrot.slane %v434, 1
      %v436 = vadd.f32 %v434, %v435
      %v437 = vadd.f32 %v427, %v429
      %v438 = vrot.slane %v437, 4
      %v439 = vadd.f32 %v437, %v438
      %v440 = vrot.slane %v439, 2
      %v441 = vadd.f32 %v439, %v440
      %v442 = vrot.slane %v441, 1
      %v443 = vadd.f32 %v441, %v442
      %v444 = vrcp.pop 16.0
      %v445 = vmul.f32 %v436, %v444
      %v446 = vmul.f32 %v443, %v444
      %v447 = vmax.f32 %v426, %v428
      %v448 = vrot.slane %v447, 4
      %v449 = vmax.f32 %v447, %v448
      %v450 = vrot.slane %v449, 2
      %v451 = vmax.f32 %v449, %v450
      %v452 = vrot.slane %v451, 1
      %v453 = vmax.f32 %v451, %v452
      %v454 = vmax.f32 %v427, %v429
      %v455 = vrot.slane %v454, 4
      %v456 = vmax.f32 %v454, %v455
      %v457 = vrot.slane %v456, 2
      %v458 = vmax.f32 %v456, %v457
      %v459 = vrot.slane %v458, 1
      %v460 = vmax.f32 %v458, %v459
      %v461 = vld [vmem:[%s3] sm:$0xff]
      %v462 = vld [vmem:[%s3 + $0x8] sm:$0xff]
      %v463 = vld [vmem:[%s3 + $0x10] sm:$0xff]
      %v464 = vld [vmem:[%s3 + $0x18] sm:$0xff]
      %v465 = vld [vmem:[%s3 + $0x20] sm:$0xff]
      %v466 = vld [vmem:[%s3 + $0x28] sm:$0xff]
      %v467 = vld [vmem:[%s3 + $0x30] sm:$0xff]
      %v468 = vld [vmem:[%s3 + $0x38] sm:$0xff]
      %v469 = vld [vmem:[%s3 + $0x40] sm:$0xff]
      %v470 = vld [vmem:[%s3 + $0x48] sm:$0xff]
      %v471 = vld [vmem:[%s3 + $0x50] sm:$0xff]
      %v472 = vld [vmem:[%s3 + $0x58] sm:$0xff]
      %v473 = vld [vmem:[%s3 + $0x60] sm:$0xff]
      %v474 = vld [vmem:[%s3 + $0x68] sm:$0xff]
      %v475 = vld [vmem:[%s3 + $0x70] sm:$0xff]
      %v476 = vld [vmem:[%s3 + $0x78] sm:$0xff]
      %v477 = vld [vmem:[%s3 + $0x80] sm:$0xff]
      %v478 = vld [vmem:[%s3 + $0x88] sm:$0xff]
      %v479 = vld [vmem:[%s3 + $0x90] sm:$0xff]
      %v480 = vld [vmem:[%s3 + $0x98] sm:$0xff]
      %v481 = vld [vmem:[%s3 + $0xa0] sm:$0xff]
      %v482 = vld [vmem:[%s3 + $0xa8] sm:$0xff]
      %v483 = vld [vmem:[%s3 + $0xb0] sm:$0xff]
      %v484 = vld [vmem:[%s3 + $0xb8] sm:$0xff]
      %v485 = vld [vmem:[%s3 + $0xc0] sm:$0xff]
      %v486 = vld [vmem:[%s3 + $0xc8] sm:$0xff]
      %v487 = vld [vmem:[%s3 + $0xd0] sm:$0xff]
      %v488 = vld [vmem:[%s3 + $0xd8] sm:$0xff]
      %v489 = vld [vmem:[%s3 + $0xe0] sm:$0xff]
      %v490 = vld [vmem:[%s3 + $0xe8] sm:$0xff]
      %v491 = vld [vmem:[%s3 + $0xf0] sm:$0xff]
      %v492 = vld [vmem:[%s3 + $0xf8] sm:$0xff]
      %v493 = vld [vmem:[%s3 + $0x100] sm:$0xff]
      %v494 = vld [vmem:[%s3 + $0x108] sm:$0xff]
      %v495 = vld [vmem:[%s3 + $0x110] sm:$0xff]
      %v496 = vld [vmem:[%s3 + $0x118] sm:$0xff]
      %v497 = vld [vmem:[%s3 + $0x120] sm:$0xff]
      %v498 = vld [vmem:[%s3 + $0x128] sm:$0xff]
      %v499 = vld [vmem:[%s3 + $0x130] sm:$0xff]
      %v500 = vld [vmem:[%s3 + $0x138] sm:$0xff]
      %v501 = vld [vmem:[%s3 + $0x140] sm:$0xff]
      %v502 = vld [vmem:[%s3 + $0x148] sm:$0xff]
      %v503 = vld [vmem:[%s3 + $0x150] sm:$0xff]
      %v504 = vld [vmem:[%s3 + $0x158] sm:$0xff]
      %v505 = vld [vmem:[%s3 + $0x160] sm:$0xff]
      %v506 = vld [vmem:[%s3 + $0x168] sm:$0xff]
      %v507 = vld [vmem:[%s3 + $0x170] sm:$0xff]
      %v508 = vld [vmem:[%s3 + $0x178] sm:$0xff]
      %v509 = vld [vmem:[%s3 + $0x180] sm:$0xff]
      %v510 = vld [vmem:[%s3 + $0x188] sm:$0xff]
      %v511 = vld [vmem:[%s3 + $0x190] sm:$0xff]
      %v512 = vld [vmem:[%s3 + $0x198] sm:$0xff]
      %v513 = vld [vmem:[%s3 + $0x1a0] sm:$0xff]
      %v514 = vld [vmem:[%s3 + $0x1a8] sm:$0xff]
      %v515 = vld [vmem:[%s3 + $0x1b0] sm:$0xff]
      %v516 = vld [vmem:[%s3 + $0x1b8] sm:$0xff]
      %v517 = vld [vmem:[%s3 + $0x1c0] sm:$0xff]
      %v518 = vld [vmem:[%s3 + $0x1c8] sm:$0xff]
      %v519 = vld [vmem:[%s3 + $0x1d0] sm:$0xff]
      %v520 = vld [vmem:[%s3 + $0x1d8] sm:$0xff]
      %v521 = vld [vmem:[%s3 + $0x1e0] sm:$0xff]
      %v522 = vld [vmem:[%s3 + $0x1e8] sm:$0xff]
      %v523 = vld [vmem:[%s3 + $0x1f0] sm:$0xff]
      %v524 = vld [vmem:[%s3 + $0x1f8] sm:$0xff]
      %v525 = vld [vmem:[%s3 + $0x200] sm:$0xff]
      %v526 = vld [vmem:[%s3 + $0x208] sm:$0xff]
      %v527 = vld [vmem:[%s3 + $0x210] sm:$0xff]
      %v528 = vld [vmem:[%s3 + $0x218] sm:$0xff]
      %v529 = vld [vmem:[%s3 + $0x220] sm:$0xff]
      %v530 = vld [vmem:[%s3 + $0x228] sm:$0xff]
      %v531 = vld [vmem:[%s3 + $0x230] sm:$0xff]
      %v532 = vld [vmem:[%s3 + $0x238] sm:$0xff]
      %v533 = vld [vmem:[%s3 + $0x240] sm:$0xff]
      %v534 = vld [vmem:[%s3 + $0x248] sm:$0xff]
      %v535 = vld [vmem:[%s3 + $0x250] sm:$0xff]
      %v536 = vld [vmem:[%s3 + $0x258] sm:$0xff]
      %v537 = vld [vmem:[%s3 + $0x260] sm:$0xff]
      %v538 = vld [vmem:[%s3 + $0x268] sm:$0xff]
      %v539 = vld [vmem:[%s3 + $0x270] sm:$0xff]
      %v540 = vld [vmem:[%s3 + $0x278] sm:$0xff]
      %v541 = vld [vmem:[%s3 + $0x280] sm:$0xff]
      %v542 = vld [vmem:[%s3 + $0x288] sm:$0xff]
      %v543 = vld [vmem:[%s3 + $0x290] sm:$0xff]
      %v544 = vld [vmem:[%s3 + $0x298] sm:$0xff]
      %v545 = vld [vmem:[%s3 + $0x2a0] sm:$0xff]
      %v546 = vld [vmem:[%s3 + $0x2a8] sm:$0xff]
      %v547 = vld [vmem:[%s3 + $0x2b0] sm:$0xff]
      %v548 = vld [vmem:[%s3 + $0x2b8] sm:$0xff]
      %v549 = vld [vmem:[%s3 + $0x2c0] sm:$0xff]
      %v550 = vld [vmem:[%s3 + $0x2c8] sm:$0xff]
      %v551 = vld [vmem:[%s3 + $0x2d0] sm:$0xff]
      %v552 = vld [vmem:[%s3 + $0x2d8] sm:$0xff]
      %v553 = vld [vmem:[%s3 + $0x2e0] sm:$0xff]
      %v554 = vld [vmem:[%s3 + $0x2e8] sm:$0xff]
      %v555 = vld [vmem:[%s3 + $0x2f0] sm:$0xff]
      %v556 = vld [vmem:[%s3 + $0x2f8] sm:$0xff]
      %v557 = vld [vmem:[%s3 + $0x300] sm:$0xff]
      %v558 = vld [vmem:[%s3 + $0x308] sm:$0xff]
      %v559 = vld [vmem:[%s3 + $0x310] sm:$0xff]
      %v560 = vld [vmem:[%s3 + $0x318] sm:$0xff]
      %v561 = vld [vmem:[%s3 + $0x320] sm:$0xff]
      %v562 = vld [vmem:[%s3 + $0x328] sm:$0xff]
      %v563 = vld [vmem:[%s3 + $0x330] sm:$0xff]
      %v564 = vld [vmem:[%s3 + $0x338] sm:$0xff]
      %v565 = vld [vmem:[%s3 + $0x340] sm:$0xff]
      %v566 = vld [vmem:[%s3 + $0x348] sm:$0xff]
      %v567 = vld [vmem:[%s3 + $0x350] sm:$0xff]
      %v568 = vld [vmem:[%s3 + $0x358] sm:$0xff]
      %v569 = vld [vmem:[%s3 + $0x360] sm:$0xff]
      %v570 = vld [vmem:[%s3 + $0x368] sm:$0xff]
      %v571 = vld [vmem:[%s3 + $0x370] sm:$0xff]
      %v572 = vld [vmem:[%s3 + $0x378] sm:$0xff]
      %v573 = vld [vmem:[%s3 + $0x380] sm:$0xff]
      %v574 = vld [vmem:[%s3 + $0x388] sm:$0xff]
      %v575 = vld [vmem:[%s3 + $0x390] sm:$0xff]
      %v576 = vld [vmem:[%s3 + $0x398] sm:$0xff]
      %v577 = vld [vmem:[%s3 + $0x3a0] sm:$0xff]
      %v578 = vld [vmem:[%s3 + $0x3a8] sm:$0xff]
      %v579 = vld [vmem:[%s3 + $0x3b0] sm:$0xff]
      %v580 = vld [vmem:[%s3 + $0x3b8] sm:$0xff]
      %v581 = vld [vmem:[%s3 + $0x3c0] sm:$0xff]
      %v582 = vld [vmem:[%s3 + $0x3c8] sm:$0xff]
      %v583 = vld [vmem:[%s3 + $0x3d0] sm:$0xff]
      %v584 = vld [vmem:[%s3 + $0x3d8] sm:$0xff]
      %v585 = vld [vmem:[%s3 + $0x3e0] sm:$0xff]
      %v586 = vld [vmem:[%s3 + $0x3e8] sm:$0xff]
      %v587 = vld [vmem:[%s3 + $0x3f0] sm:$0xff]
      %v588 = vld [vmem:[%s3 + $0x3f8] sm:$0xff]
      %589 = vmatprep.subr.mxu0 %v462
      %590 = vmatpush1.msra.mxu0 %v461
      %591 = vmatprep.subr.mxu0 %v464
      %592 = vmatpush1.msra.mxu0 %v463
      %593 = vmatprep.subr.mxu0 %v466
      %594 = vmatpush1.msra.mxu0 %v465
      %595 = vmatprep.subr.mxu0 %v468
      %596 = vmatpush1.msra.mxu0 %v467
      %597 = vmatprep.subr.mxu0 %v470
      %598 = vmatpush1.msra.mxu0 %v469
      %599 = vmatprep.subr.mxu0 %v472
      %600 = vmatpush1.msra.mxu0 %v471
      %601 = vmatprep.subr.mxu0 %v474
      %602 = vmatpush1.msra.mxu0 %v473
      %603 = vmatprep.subr.mxu0 %v476
      %604 = vmatpush1.msra.mxu0 %v475
      %605 = vmatprep.subr.mxu0 %v478
      %606 = vmatpush1.msra.mxu0 %v477
      %607 = vmatprep.subr.mxu0 %v480
      %608 = vmatpush1.msra.mxu0 %v479
      %609 = vmatprep.subr.mxu0 %v482
      %610 = vmatpush1.msra.mxu0 %v481
      %611 = vmatprep.subr.mxu0 %v484
      %612 = vmatpush1.msra.mxu0 %v483
      %613 = vmatprep.subr.mxu0 %v486
      %614 = vmatpush1.msra.mxu0 %v485
      %615 = vmatprep.subr.mxu0 %v488
      %616 = vmatpush1.msra.mxu0 %v487
      %617 = vmatprep.subr.mxu0 %v490
      %618 = vmatpush1.msra.mxu0 %v489
      %619 = vmatprep.subr.mxu0 %v492
      %620 = vmatpush1.msra.mxu0 %v491
      %621 = vmatprep.subr.mxu0 %v494
      %622 = vmatpush1.msra.mxu0 %v493
      %623 = vmatprep.subr.mxu0 %v496
      %624 = vmatpush1.msra.mxu0 %v495
      %625 = vmatprep.subr.mxu0 %v498
      %626 = vmatpush1.msra.mxu0 %v497
      %627 = vmatprep.subr.mxu0 %v500
      %628 = vmatpush1.msra.mxu0 %v499
      %629 = vmatprep.subr.mxu0 %v502
      %630 = vmatpush1.msra.mxu0 %v501
      %631 = vmatprep.subr.mxu0 %v504
      %632 = vmatpush1.msra.mxu0 %v503
      %633 = vmatprep.subr.mxu0 %v506
      %634 = vmatpush1.msra.mxu0 %v505
      %635 = vmatprep.subr.mxu0 %v508
      %636 = vmatpush1.msra.mxu0 %v507
      %637 = vmatprep.subr.mxu0 %v510
      %638 = vmatpush1.msra.mxu0 %v509
      %639 = vmatprep.subr.mxu0 %v512
      %640 = vmatpush1.msra.mxu0 %v511
      %641 = vmatprep.subr.mxu0 %v514
      %642 = vmatpush1.msra.mxu0 %v513
      %643 = vmatprep.subr.mxu0 %v516
      %644 = vmatpush1.msra.mxu0 %v515
      %645 = vmatprep.subr.mxu0 %v518
      %646 = vmatpush1.msra.mxu0 %v517
      %647 = vmatprep.subr.mxu0 %v520
      %648 = vmatpush1.msra.mxu0 %v519
      %649 = vmatprep.subr.mxu0 %v522
      %650 = vmatpush1.msra.mxu0 %v521
      %651 = vmatprep.subr.mxu0 %v524
      %652 = vmatpush1.msra.mxu0 %v523
      %653 = vmatprep.mubr.f32.mxu0 %v446
      %654 = vmatmul.mubr.f32.gmra.mrb[0].mxu0 %v445
      %v655 = vpop.f32.mrb[0].mxu0
      %v656 = vadd.f32 0.0, %v655
      %v657 = vpop.f32.mrb[0].mxu0
      %v658 = vadd.f32 0.0, %v657
      %659 = vdwg.mxu0
      %660 = vmatprep.subr.mxu0 %v526
      %661 = vmatpush1.msra.mxu0 %v525
      %662 = vmatprep.subr.mxu0 %v528
      %663 = vmatpush1.msra.mxu0 %v527
      %664 = vmatprep.subr.mxu0 %v530
      %665 = vmatpush1.msra.mxu0 %v529
      %666 = vmatprep.subr.mxu0 %v532
      %667 = vmatpush1.msra.mxu0 %v531
      %668 = vmatprep.subr.mxu0 %v534
      %669 = vmatpush1.msra.mxu0 %v533
      %670 = vmatprep.subr.mxu0 %v536
      %671 = vmatpush1.msra.mxu0 %v535
      %672 = vmatprep.subr.mxu0 %v538
      %673 = vmatpush1.msra.mxu0 %v537
      %674 = vmatprep.subr.mxu0 %v540
      %675 = vmatpush1.msra.mxu0 %v539
      %676 = vmatprep.subr.mxu0 %v542
      %677 = vmatpush1.msra.mxu0 %v541
      %678 = vmatprep.subr.mxu0 %v544
      %679 = vmatpush1.msra.mxu0 %v543
      %680 = vmatprep.subr.mxu0 %v546
      %681 = vmatpush1.msra.mxu0 %v545
      %682 = vmatprep.subr.mxu0 %v548
      %683 = vmatpush1.msra.mxu0 %v547
      %684 = vmatprep.subr.mxu0 %v550
      %685 = vmatpush1.msra.mxu0 %v549
      %686 = vmatprep.subr.mxu0 %v552
      %687 = vmatpush1.msra.mxu0 %v551
      %688 = vmatprep.subr.mxu0 %v554
      %689 = vmatpush1.msra.mxu0 %v553
      %690 = vmatprep.subr.mxu0 %v556
      %691 = vmatpush1.msra.mxu0 %v555
      %692 = vmatprep.subr.mxu0 %v558
      %693 = vmatpush1.msra.mxu0 %v557
      %694 = vmatprep.subr.mxu0 %v560
      %695 = vmatpush1.msra.mxu0 %v559
      %696 = vmatprep.subr.mxu0 %v562
      %697 = vmatpush1.msra.mxu0 %v561
      %698 = vmatprep.subr.mxu0 %v564
      %699 = vmatpush1.msra.mxu0 %v563
      %700 = vmatprep.subr.mxu0 %v566
      %701 = vmatpush1.msra.mxu0 %v565
      %702 = vmatprep.subr.mxu0 %v568
      %703 = vmatpush1.msra.mxu0 %v567
      %704 = vmatprep.subr.mxu0 %v570
      %705 = vmatpush1.msra.mxu0 %v569
      %706 = vmatprep.subr.mxu0 %v572
      %707 = vmatpush1.msra.mxu0 %v571
      %708 = vmatprep.subr.mxu0 %v574
      %709 = vmatpush1.msra.mxu0 %v573
      %710 = vmatprep.subr.mxu0 %v576
      %711 = vmatpush1.msra.mxu0 %v575
      %712 = vmatprep.subr.mxu0 %v578
      %713 = vmatpush1.msra.mxu0 %v577
      %714 = vmatprep.subr.mxu0 %v580
      %715 = vmatpush1.msra.mxu0 %v579
      %716 = vmatprep.subr.mxu0 %v582
      %717 = vmatpush1.msra.mxu0 %v581
      %718 = vmatprep.subr.mxu0 %v584
      %719 = vmatpush1.msra.mxu0 %v583
      %720 = vmatprep.subr.mxu0 %v586
      %721 = vmatpush1.msra.mxu0 %v585
      %722 = vmatprep.subr.mxu0 %v588
      %723 = vmatpush1.msra.mxu0 %v587
      %724 = vmatprep.mubr.f32.mxu0 %v460
      %725 = vmatmul.mubr.f32.gmra.mrb[0].mxu0 %v453
      %v726 = vpop.f32.mrb[0].mxu0
      %v727 = vadd.f32 %v656, %v726
      %v728 = vpop.f32.mrb[0].mxu0
      %v729 = vadd.f32 %v658, %v728
      %730 = vdwg.mxu0
      %v731 = vxor.u32 %v727, 2147483648
      %v732 = vxor.u32 %v729, 2147483648
      %v733 = vmul.f32 %v731, 1.442695
      %v734 = vpow.pop %v733
      %v735 = vmul.f32 %v732, 1.442695
      %v736 = vpow.pop %v735
      %v737 = vadd.f32 %v734, 1.0
      %v738 = vadd.f32 %v736, 1.0
      %v739 = vrcp.pop %v737
      %v740 = vmul.f32 1.0, %v739
      %v741 = vrcp.pop %v738
      %v742 = vmul.f32 1.0, %v741
      %v743 = vlaneseq
      %v744 = vshrl.u32 %v743, 7
      %v745 = vsub.s32 0, %v744
      %v746 = vrot.slane %v740, %v745
      %v747 = vlaneseq
      %v748 = vshrl.u32 %v747, 7
      %v749 = vsub.s32 0, %v748
      %v750 = vrot.slane %v742, %v749
      %v751 = vmul.f32 %v421, %v746
      %v752 = vmul.f32 %v421, %v750
      %v753 = vmul.f32 %v425, %v746
      %v754 = vmul.f32 %v425, %v750
      %v755 = vmul.f32 %v200, %v751
      %v756 = vmul.f32 %v201, %v752
      %v757 = vmul.f32 %v202, %v753
      %v758 = vmul.f32 %v203, %v754
      %v759 = vpack.c.bf16 %v757, %v755
      %v760 = vpack.c.bf16 %v758, %v756
      %v763 = vunpack.c.l.b16 %v759
      %v764 = vunpack.c.l.b16 %v760
      %v765 = vunpack.c.h.b16 %v759
      %v766 = vunpack.c.h.b16 %v760
      %v767 = vpack.c.b16 %v764, %v763
      %v768 = vpack.c.b16 %v766, %v765
      %771 = vst [vmem:[%s197] sm:$0xff] %v767
      %772 = vst [vmem:[%s197 + $0x8] sm:$0xff] %v768
      %p773 = scmp.lt.s32.totalorder %s15, 1
      %s774 = scalar_select %p773, %s15, 1
      %s775 = smul.addr %s774, 4
      %s776 = smul.addr %s775, 4
      %s777 = scalar_lea.vmem %s4, %s776
      // Predicated region
      $region37: #{forward.1} parent=35 // pred_check
        %p778 = pneg %p122
      $region38: #{forward.1} parent=35 // pred_check_branch
        %780 = sbr.rel (%p778) target = $region40
      $region39: #{forward.1} parent=35 // pred_region
        _
      $region40: #{forward.1} parent=35 // pred_fallthru
        _
    $region36: #{forward.1} parent=5 // pred_fallthru
      _
    %p781 = scmp.le.s32.totalorder 2, %s10
    // Predicated region
    $region41: #{forward.1} parent=5 // pred_check
      %p782 = pneg %p781
    $region42: #{forward.1} parent=5 // pred_check_branch
      %784 = sbr.rel (%p782) target = $region44
    $region43: #{forward.1} parent=5 // pred_region
      %s785 = ssub.s32 %s10, 2
      // Predicated region
      $region45: #{forward.1} parent=43 // pred_check
        %p786 = pneg %p128
      $region46: #{forward.1} parent=43 // pred_check_branch
        %788 = sbr.rel (%p786) target = $region48
      $region47: #{forward.1} parent=43 // pred_region
        %p789 = scmp.lt.s32.totalorder %s16, 1
        %s790 = scalar_select %p789, %s16, 1
        %s791 = smul.addr %s790, 4
        %s792 = smul.addr %s791, 4
        %s793 = scalar_lea.vmem %s4, %s792
      $region48: #{forward.1} parent=43 // pred_fallthru
        _
    $region44: #{forward.1} parent=5 // pred_fallthru
      _
  $region6: #{forward.1} parent=0 // loop_footer
    %s14 = sadd.s32 1, %s10
  $region7: #{forward.1} parent=0 // loop_footer_branch
    %9 = sbr.rel target = $region3
  $region8: #{forward.1} parent=0 // loop_exit
    _

</llo_original>
